<compile_context>
chip_gen: v6e
topology: v6e:2x2x1
jax: 0.10.0
libtpu: 0.0.40
codegen_flags: <defaults>
</compile_context>

<pallas_src>
import math

import jax
import jax.numpy as jnp
from jax.experimental import pallas as pl
from jax.experimental.pallas import tpu as pltpu

# ----------------------------- config -----------------------------------
NUM_CLASSES = 8
ALPHA = 0.25          # focal loss alpha
GAMMA = 2.0           # gamma == 2 -> pt**gamma computed as pt*pt in-kernel
CLS_WEIGHT = 2.0      # loss_cls loss_weight
BBOX_WEIGHT = 5.0     # loss_bbox loss_weight
GIOU_WEIGHT = 2.0     # loss_giou loss_weight
AUX_WEIGHT = 0.3      # density loss weight
EPS = 1e-6

LANE = 128
SUBLANE = 8
BF16_ROWS = 16        # bf16 packs 16 rows/vreg -> align bf16 chunk rows to 16
PAD_LOGIT = -30.0     # padded logits -> sigmoid ~ 0, BCE ~ 0 (with target 0)

# Chunk-row caps per grid step.  512 rows x 128 lanes reaches ~85% of the HBM
# roofline in the tile sweep and keeps double-buffered chunk VMEM ~1-2 MB even
# on v7x (64 MiB physical).  v5e/v6e could take 1024-2048; 512 is portable.
TM_MAX = 512          # logits / one-hot chunk rows
TD_MAX = 512          # density chunk rows

# lanes (on sublane 0) of the packed per-level result row
_FOCAL_LANE, _L1_LANE, _GIOU_LANE, _MSE_LANE = 0, 1, 2, 3


def _round_up(x, m):
    return ((x + m - 1) // m) * m


def _cdiv(a, b):
    return (a + b - 1) // b


# --------------------------- fused Pallas kernel -------------------------
def _fused_loss_kernel(logits_ref, onehot_ref, bnorm_ref, babs_ref, mask_ref,
                       dpred_ref, dgt_ref, out_ref):
    """grid = (level, chunk).

    Per level, the packed (1, 128) output row holds lanes
    [focal_sum, l1_sum, giou_sum, mse_sum].  Focal and density partial sums
    accumulate across the chunk axis; box sums are computed once at chunk 0.
    """
    c = pl.program_id(1)

    # -------- sigmoid focal loss, partial sum over this logits chunk --------
    x = logits_ref[0].astype(jnp.float32)            # (TM, 128), bf16 in HBM
    t = onehot_ref[0].astype(jnp.float32)            # (TM, 128), shared slab
    e = jnp.exp(-jnp.abs(x))                         # single EUP exp, reused
    r = 1.0 / (1.0 + e)
    p = jnp.where(x >= 0.0, r, e * r)                # sigmoid(x)
    bce = jnp.maximum(x, 0.0) - x * t + jnp.log1p(e)
    pt = (1.0 - p) * t + p * (1.0 - t)
    mod = pt * pt if GAMMA == 2.0 else jnp.power(pt, GAMMA)
    focal_w = (ALPHA * t + (1.0 - ALPHA) * (1.0 - t)) * mod
    focal_sum = jnp.sum(bce * focal_w)

    # -------- density MSE partial sum (zero-padded entries -> exact 0) ------
    dd = dpred_ref[0] - dgt_ref[0]                   # (TD, 128)
    mse_sum = jnp.sum(dd * dd)

    lane = jax.lax.broadcasted_iota(jnp.int32, (1, LANE), 1)
    partial = (jnp.where(lane == _FOCAL_LANE, focal_sum, 0.0) +
               jnp.where(lane == _MSE_LANE, mse_sum, 0.0))

    @pl.when(c == 0)
    def _():
        # -------- matched boxes: L1 on normalized xyxy -----------------------
        mask = mask_ref[0]                           # (1, K_pad) validity mask
        bn = bnorm_ref[0]                            # (8, K_pad): rows 0-3 pred, 4-7 tgt
        l1_sum = jnp.sum(jnp.abs(bn[0:4] - bn[4:8]) * mask)

        # -------- matched boxes: GIoU on absolute xyxy -----------------------
        # TODO(synk): if K grows well past 128 (real dynamic-k matching), move
        # to full (4,K) slab ops + pltpu.roll over sublanes for the combines.
        ba = babs_ref[0]                             # (8, K_pad)
        px1, py1, px2, py2 = ba[0:1], ba[1:2], ba[2:3], ba[3:4]
        tx1, ty1, tx2, ty2 = ba[4:5], ba[5:6], ba[6:7], ba[7:8]
        area_p = (px2 - px1) * (py2 - py1)
        area_t = (tx2 - tx1) * (ty2 - ty1)
        inter = (jnp.maximum(jnp.minimum(px2, tx2) - jnp.maximum(px1, tx1), 0.0) *
                 jnp.maximum(jnp.minimum(py2, ty2) - jnp.maximum(py1, ty1), 0.0))
        union = jnp.maximum(area_p + area_t - inter, EPS)
        enclose = jnp.maximum(
            jnp.maximum(jnp.maximum(px2, tx2) - jnp.minimum(px1, tx1), 0.0) *
            jnp.maximum(jnp.maximum(py2, ty2) - jnp.minimum(py1, ty1), 0.0), EPS)
        giou = inter / union - (enclose - union) / enclose
        giou_sum = jnp.sum((1.0 - giou) * mask)

        out_ref[0] = (partial +
                      jnp.where(lane == _L1_LANE, l1_sum, 0.0) +
                      jnp.where(lane == _GIOU_LANE, giou_sum, 0.0))

    @pl.when(c > 0)
    def _():
        out_ref[0] = out_ref[0] + partial


def _fused_level_sums(logits_l, onehot_l, bnorm_l, babs_l, mask_l,
                      dpred_l, dgt_l, tm, td, nchunks):
    L, M8p, _ = logits_l.shape
    D8p = dpred_l.shape[1]
    K_pad = bnorm_l.shape[2]

    bytes_in = int(
        logits_l.size * logits_l.dtype.itemsize +
        onehot_l.size * onehot_l.dtype.itemsize +
        (bnorm_l.size + babs_l.size + mask_l.size +
         dpred_l.size + dgt_l.size) * 4)
    cost = pl.CostEstimate(
        flops=int(16 * L * M8p * LANE + 3 * L * D8p * LANE + 40 * L * K_pad),
        transcendentals=int(2 * L * M8p * LANE),     # exp + log1p per logit
        bytes_accessed=bytes_in + int(L * LANE * 4))

    return pl.pallas_call(
        _fused_loss_kernel,
        out_shape=jax.ShapeDtypeStruct((L, 1, LANE), jnp.float32),
        grid_spec=pltpu.PrefetchScalarGridSpec(
            num_scalar_prefetch=0,
            grid=(L, nchunks),                       # level slow, chunks fast
            in_specs=[
                # per-level logits, chunked along rows
                pl.BlockSpec((1, tm, LANE), lambda l, c: (l, c, 0)),
                # ONE shared one-hot slab (constant across levels)
                pl.BlockSpec((1, tm, LANE), lambda l, c: (0, c, 0)),
                # per-level matched boxes (resident across the chunk axis)
                pl.BlockSpec((1, 8, K_pad), lambda l, c: (l, 0, 0)),
                pl.BlockSpec((1, 8, K_pad), lambda l, c: (l, 0, 0)),
                # ONE shared validity mask
                pl.BlockSpec((1, 1, K_pad), lambda l, c: (0, 0, 0)),
                # per-level density maps, chunked along rows
                pl.BlockSpec((1, td, LANE), lambda l, c: (l, c, 0)),
                pl.BlockSpec((1, td, LANE), lambda l, c: (l, c, 0)),
            ],
            out_specs=pl.BlockSpec((1, 1, LANE), lambda l, c: (l, 0, 0)),
        ),
        compiler_params=pltpu.CompilerParams(
            # level axis parallel (v7x: split across the 2 TCs), chunk axis is
            # a reduction into the resident output row.
            dimension_semantics=("parallel", "arbitrary"),
            # Explicit budget: chunked inputs are double-buffered by default;
            # 32 MiB has ample headroom on all parts incl. v7x (64 MiB phys).
            vmem_limit_bytes=32 * 1024 * 1024),
        cost_estimate=cost,
    )(logits_l, onehot_l, bnorm_l, babs_l, mask_l, dpred_l, dgt_l)


# ------------------------------ glue -------------------------------------
def bbox_cxcywh_to_xyxy(b):
    cx, cy, w, h = b[..., 0], b[..., 1], b[..., 2], b[..., 3]
    return jnp.stack(
        [cx - 0.5 * w, cy - 0.5 * h, cx + 0.5 * w, cy + 0.5 * h], axis=-1)


def simple_assigner(outputs, batch_gt_instances):
    # TODO(synk): deterministic identity matching in place of DiffusionDetMatcher.
    indices = []
    for gt in batch_gt_instances:
        n = gt['labels'].shape[0]
        idx = jnp.arange(n, dtype=jnp.int32)
        indices.append((idx, idx))
    return indices


def enhanced_criterion_forward(outputs, batch_gt_instances,
                               num_classes=NUM_CLASSES,
                               deep_supervision=True,
                               aux_weight=AUX_WEIGHT,
                               use_adem=True):
    levels = [outputs]
    if deep_supervision:
        assert 'aux_outputs' in outputs
        levels = levels + list(outputs['aux_outputs'])
    L = len(levels)

    # identity matching -> indices identical across levels, compute once.
    indices = simple_assigner(outputs, batch_gt_instances)

    # ---------------- classification targets (shared across levels) ---------
    B, N, C = outputs['pred_logits'].shape
    target_classes = jnp.full((B, N), num_classes, dtype=jnp.int32)
    total_gt = 0
    for b, (src_i, tgt_j) in enumerate(indices):
        labels_b = batch_gt_instances[b]['labels'][tgt_j]
        target_classes = target_classes.at[b, src_i].set(labels_b)
        total_gt += int(labels_b.shape[0])
    num_instances = max(total_gt, 1)
    # TODO(synk): the reference typically all-reduces the instance count across
    # devices for multi-host training; host-side python int used here.
    onehot = jax.nn.one_hot(target_classes, num_classes + 1,
                            dtype=jnp.float32)[..., :num_classes]

    # ---------------- density maps (optional per level) ---------------------
    main_has_density = use_adem and ('aux_pred' in outputs) and ('aux_gt' in outputs)
    has_density, d_pred_flat, d_gt_flat, d_counts = [], [], [], []
    for lv in levels:
        use_it = main_has_density and ('aux_pred' in lv) and ('aux_gt' in lv)
        has_density.append(use_it)
        if use_it:
            pred_d = lv['aux_pred']
            gt_d = lv['aux_gt']
            if gt_d.ndim != pred_d.ndim:
                gt_d = gt_d[:, None]              # unsqueeze channel dim
            if gt_d.shape[2:] != pred_d.shape[2:]:
                # bilinear, align_corners=False equivalent (half-pixel centers)
                gt_d = jax.image.resize(
                    gt_d, gt_d.shape[:2] + pred_d.shape[2:], method='bilinear')
            gt_d = jnp.broadcast_to(gt_d, pred_d.shape)
            d_counts.append(math.prod(pred_d.shape))
            d_pred_flat.append(pred_d.reshape(-1).astype(jnp.float32))
            d_gt_flat.append(gt_d.reshape(-1).astype(jnp.float32))
        else:
            d_counts.append(1)
            d_pred_flat.append(jnp.zeros((0,), jnp.float32))
            d_gt_flat.append(jnp.zeros((0,), jnp.float32))

    # ---------------- shared chunk axis over logits + density slabs ---------
    total = B * N * C
    rows_logit = _cdiv(max(total, 1), LANE)
    rows_dens = _cdiv(max(max(int(x.shape[0]) for x in d_pred_flat), 1), LANE)
    nchunks = max(_cdiv(rows_logit, TM_MAX), _cdiv(rows_dens, TD_MAX), 1)
    TM = _round_up(max(_cdiv(rows_logit, nchunks), 1), BF16_ROWS)  # bf16 slabs
    M8p = nchunks * TM
    TD = _round_up(max(_cdiv(rows_dens, nchunks), 1), SUBLANE)     # f32 slabs
    D8p = nchunks * TD

    def lane_dense(arr, pad_value, rows, dtype):
        flat = arr.reshape(-1).astype(dtype)
        flat = jnp.pad(flat, (0, rows * LANE - flat.shape[0]),
                       constant_values=pad_value)
        return flat.reshape(rows, LANE)

    # logits: per-level bf16 slabs.  onehot: ONE shared bf16 slab (values 0/1
    # are exact in bf16); NOT broadcast L times in HBM.
    logits_l = jnp.stack(
        [lane_dense(lv['pred_logits'], PAD_LOGIT, M8p, jnp.bfloat16)
         for lv in levels], axis=0)                       # (L, M8p, 128) bf16
    onehot_l = lane_dense(onehot, 0.0, M8p, jnp.bfloat16)[None]  # (1, M8p, 128)

    # ---------------- matched boxes, padded to fixed lane width K_pad -------
    K = total_gt
    K_pad = max(LANE, _round_up(max(K, 1), LANE))

    def pad_cols(x_t):  # (4, k) -> (4, K_pad), zero pad (masked in kernel)
        return jnp.pad(x_t, ((0, 0), (0, K_pad - x_t.shape[1])))

    if K > 0:
        tgt_abs, tgt_norm, img_sz = [], [], []
        for b, (src_i, tgt_j) in enumerate(indices):
            gt = batch_gt_instances[b]
            tgt_abs.append(gt['bboxes'][tgt_j])
            tgt_norm.append(bbox_cxcywh_to_xyxy(gt['norm_bboxes_cxcywh'][tgt_j]))
            img_sz.append(jnp.broadcast_to(gt['image_size'][None],
                                           (int(tgt_j.shape[0]), 4)))
        tgt_abs_t = pad_cols(jnp.concatenate(tgt_abs, 0).astype(jnp.float32).T)
        tgt_norm_t = pad_cols(jnp.concatenate(tgt_norm, 0).astype(jnp.float32).T)
        img_sz_cat = jnp.concatenate(img_sz, 0).astype(jnp.float32)

        bnorm_levels, babs_levels = [], []
        for lv in levels:
            pb = lv['pred_boxes']
            pred_cat = jnp.concatenate(
                [pb[b][src_i] for b, (src_i, _) in enumerate(indices)],
                axis=0).astype(jnp.float32)
            pred_abs_t = pad_cols(pred_cat.T)
            pred_norm_t = pad_cols((pred_cat / img_sz_cat).T)
            bnorm_levels.append(jnp.concatenate([pred_norm_t, tgt_norm_t], 0))
            babs_levels.append(jnp.concatenate([pred_abs_t, tgt_abs_t], 0))
        bnorm_l = jnp.stack(bnorm_levels, 0)   # (L, 8, K_pad)
        babs_l = jnp.stack(babs_levels, 0)     # (L, 8, K_pad)
    else:
        bnorm_l = jnp.zeros((L, 8, K_pad), jnp.float32)
        babs_l = jnp.zeros((L, 8, K_pad), jnp.float32)

    # ONE shared validity mask (not broadcast per level).
    mask_l = (jnp.arange(K_pad) < K).astype(jnp.float32).reshape(1, 1, K_pad)

    # density slabs, padded to a multiple of 8 rows (chunked-block layout rule)
    dpred_l = jnp.stack(
        [jnp.pad(x, (0, D8p * LANE - x.shape[0])).reshape(D8p, LANE)
         for x in d_pred_flat], axis=0)                   # (L, D8p, 128)
    dgt_l = jnp.stack(
        [jnp.pad(x, (0, D8p * LANE - x.shape[0])).reshape(D8p, LANE)
         for x in d_gt_flat], axis=0)

    # ---------------- single fused Pallas call over all levels --------------
    res = _fused_level_sums(logits_l, onehot_l, bnorm_l, babs_l, mask_l,
                            dpred_l, dgt_l, TM, TD, nchunks)   # (L, 1, 128)
    focal = res[:, 0, _FOCAL_LANE]
    l1 = res[:, 0, _L1_LANE]
    giou = res[:, 0, _GIOU_LANE]
    mse = res[:, 0, _MSE_LANE]

    losses = {}
    for li in range(L):
        prefix = '' if li == 0 else f's.{li - 1}.'
        losses[prefix + 'loss_cls'] = CLS_WEIGHT * focal[li] / num_instances
        if K > 0:
            losses[prefix + 'loss_bbox'] = BBOX_WEIGHT * l1[li] / K
            losses[prefix + 'loss_giou'] = GIOU_WEIGHT * giou[li] / K
        else:
            zero = jnp.sum(levels[li]['pred_boxes']) * 0.0
            losses[prefix + 'loss_bbox'] = zero
            losses[prefix + 'loss_giou'] = zero
    for li in range(L):
        if has_density[li]:
            prefix = '' if li == 0 else f's.{li - 1}.'
            losses[prefix + 'loss_density'] = aux_weight * mse[li] / d_counts[li]
    return losses


# ------------------------- example inputs --------------------------------
def make_gt(key, num_gt, num_classes, img_wh):
    k1, k2, k3 = jax.random.split(key, 3)
    labels = jax.random.randint(k1, (num_gt,), 0, num_classes, dtype=jnp.int32)
    cxcy = jax.random.uniform(k2, (num_gt, 2), minval=0.25, maxval=0.75)
    wh = jax.random.uniform(k3, (num_gt, 2), minval=0.10, maxval=0.30)
    norm_cxcywh = jnp.concatenate([cxcy, wh], axis=-1).astype(jnp.float32)
    image_size = jnp.array([img_wh, img_wh, img_wh, img_wh], jnp.float32)
    bboxes = bbox_cxcywh_to_xyxy(norm_cxcywh) * image_size
    return dict(labels=labels, norm_bboxes_cxcywh=norm_cxcywh,
                bboxes=bboxes, image_size=image_size)


def make_outputs(key, B, N, C, img_wh, H, W):
    k1, k2, k3, k4, k5 = jax.random.split(key, 5)
    logits = jax.random.normal(k1, (B, N, C), jnp.float32)
    cxcy = jax.random.uniform(k2, (B, N, 2), minval=0.2, maxval=0.8)
    wh = jax.random.uniform(k3, (B, N, 2), minval=0.05, maxval=0.40)
    boxes = bbox_cxcywh_to_xyxy(jnp.concatenate([cxcy, wh], -1)) * img_wh
    aux_pred = jax.random.normal(k4, (B, 1, H, W), jnp.float32)   # NCHW
    aux_gt = jax.random.uniform(k5, (B, H, W), jnp.float32)       # no channel dim
    return dict(pred_logits=logits, pred_boxes=boxes,
                aux_pred=aux_pred, aux_gt=aux_gt)


if __name__ == "__main__":
    key = jax.random.PRNGKey(0)
    B, N, C = 2, 64, NUM_CLASSES
    H = W = 16
    IMG_WH = 128.0
    num_gt_per_img = [3, 5]

    k_main, k_aux, k_gt0, k_gt1 = jax.random.split(key, 4)
    outputs = make_outputs(k_main, B, N, C, IMG_WH, H, W)
    outputs['aux_outputs'] = [make_outputs(k_aux, B, N, C, IMG_WH, H, W)]
    batch_gt_instances = [
        make_gt(k_gt0, num_gt_per_img[0], NUM_CLASSES, IMG_WH),
        make_gt(k_gt1, num_gt_per_img[1], NUM_CLASSES, IMG_WH),
    ]

    losses = enhanced_criterion_forward(outputs, batch_gt_instances)
    for v in losses.values():
        jax.block_until_ready(v)
    print("KERNEL_OK")
</pallas_src>

<mosaic_0001>
module attributes {stable_mosaic.version = 11 : i64} {
  func.func @_fused_loss_kernel(%arg0: i32, %arg1: i32, %arg2: memref<1x16x128xbf16, #tpu.memory_space<vmem>>, %arg3: memref<1x16x128xbf16, #tpu.memory_space<vmem>>, %arg4: memref<1x8x128xf32, #tpu.memory_space<vmem>>, %arg5: memref<1x8x128xf32, #tpu.memory_space<vmem>>, %arg6: memref<1x1x128xf32, #tpu.memory_space<vmem>>, %arg7: memref<1x8x128xf32, #tpu.memory_space<vmem>>, %arg8: memref<1x8x128xf32, #tpu.memory_space<vmem>>, %arg9: memref<1x1x128xf32, #tpu.memory_space<vmem>>) attributes {dimension_semantics = [#tpu.dimension_semantics<parallel>, #tpu.dimension_semantics<arbitrary>], iteration_bounds = array<i64: 2, 1>, scalar_prefetch = 0 : i64, scratch_operands = 0 : i64, tpu.core_type = #tpu.core_type<tc>, window_params = [{transform_indices = @transform_0, window_bounds = array<i64: 1, 16, 128>}, {transform_indices = @transform_1, window_bounds = array<i64: 1, 16, 128>}, {transform_indices = @transform_2, window_bounds = array<i64: 1, 8, 128>}, {transform_indices = @transform_3, window_bounds = array<i64: 1, 8, 128>}, {pipeline_mode = #tpu.pipeline_mode<synchronous>, transform_indices = @transform_4, window_bounds = array<i64: 1, 1, 128>}, {transform_indices = @transform_5, window_bounds = array<i64: 1, 8, 128>}, {transform_indices = @transform_6, window_bounds = array<i64: 1, 8, 128>}, {transform_indices = @transform_7, window_bounds = array<i64: 1, 1, 128>}]} {
    %c0 = arith.constant 0 : index
    %c0_0 = arith.constant 0 : index
    %c0_1 = arith.constant 0 : index
    %0 = vector.load %arg2[%c0, %c0_0, %c0_1] : memref<1x16x128xbf16, #tpu.memory_space<vmem>>, vector<1x16x128xbf16>
    %1 = vector.shape_cast %0 : vector<1x16x128xbf16> to vector<16x128xbf16>
    %2 = arith.extf %1 : vector<16x128xbf16> to vector<16x128xf32>
    %c0_2 = arith.constant 0 : index
    %c0_3 = arith.constant 0 : index
    %c0_4 = arith.constant 0 : index
    %3 = vector.load %arg3[%c0_2, %c0_3, %c0_4] : memref<1x16x128xbf16, #tpu.memory_space<vmem>>, vector<1x16x128xbf16>
    %4 = vector.shape_cast %3 : vector<1x16x128xbf16> to vector<16x128xbf16>
    %5 = arith.extf %4 : vector<16x128xbf16> to vector<16x128xf32>
    %6 = math.absf %2 : vector<16x128xf32>
    %cst = arith.constant 0.000000e+00 : f32
    %7 = vector.broadcast %cst : f32 to vector<16x128xf32>
    %8 = arith.subf %7, %6 : vector<16x128xf32>
    %9 = math.exp %8 : vector<16x128xf32>
    %cst_5 = arith.constant 1.000000e+00 : f32
    %10 = vector.broadcast %cst_5 : f32 to vector<16x128xf32>
    %11 = arith.addf %10, %9 : vector<16x128xf32>
    %cst_6 = arith.constant 1.000000e+00 : f32
    %12 = vector.broadcast %cst_6 : f32 to vector<16x128xf32>
    %13 = arith.divf %12, %11 : vector<16x128xf32>
    %cst_7 = arith.constant 0.000000e+00 : f32
    %14 = vector.broadcast %cst_7 : f32 to vector<16x128xf32>
    %15 = arith.cmpf oge, %2, %14 : vector<16x128xf32>
    %16 = arith.mulf %9, %13 : vector<16x128xf32>
    %17 = arith.select %15, %13, %16 : vector<16x128xi1>, vector<16x128xf32>
    %cst_8 = arith.constant 0.000000e+00 : f32
    %18 = vector.broadcast %cst_8 : f32 to vector<16x128xf32>
    %19 = arith.maximumf %2, %18 : vector<16x128xf32>
    %20 = arith.mulf %2, %5 : vector<16x128xf32>
    %21 = arith.subf %19, %20 : vector<16x128xf32>
    %22 = math.log1p %9 : vector<16x128xf32>
    %23 = arith.addf %21, %22 : vector<16x128xf32>
    %cst_9 = arith.constant 1.000000e+00 : f32
    %24 = vector.broadcast %cst_9 : f32 to vector<16x128xf32>
    %25 = arith.subf %24, %17 : vector<16x128xf32>
    %26 = arith.mulf %25, %5 : vector<16x128xf32>
    %cst_10 = arith.constant 1.000000e+00 : f32
    %27 = vector.broadcast %cst_10 : f32 to vector<16x128xf32>
    %28 = arith.subf %27, %5 : vector<16x128xf32>
    %29 = arith.mulf %17, %28 : vector<16x128xf32>
    %30 = arith.addf %26, %29 : vector<16x128xf32>
    %31 = arith.mulf %30, %30 : vector<16x128xf32>
    %cst_11 = arith.constant 2.500000e-01 : f32
    %32 = vector.broadcast %cst_11 : f32 to vector<16x128xf32>
    %33 = arith.mulf %32, %5 : vector<16x128xf32>
    %cst_12 = arith.constant 1.000000e+00 : f32
    %34 = vector.broadcast %cst_12 : f32 to vector<16x128xf32>
    %35 = arith.subf %34, %5 : vector<16x128xf32>
    %cst_13 = arith.constant 7.500000e-01 : f32
    %36 = vector.broadcast %cst_13 : f32 to vector<16x128xf32>
    %37 = arith.mulf %36, %35 : vector<16x128xf32>
    %38 = arith.addf %33, %37 : vector<16x128xf32>
    %39 = arith.mulf %38, %31 : vector<16x128xf32>
    %40 = arith.mulf %23, %39 : vector<16x128xf32>
    %41 = vector.shape_cast %40 : vector<16x128xf32> to vector<1x16x128xf32>
    %cst_14 = arith.constant dense<0.000000e+00> : vector<1xf32>
    %42 = vector.multi_reduction <add>, %41, %cst_14 [1, 2] : vector<1x16x128xf32> to vector<1xf32>
    %43 = vector.shape_cast %42 : vector<1xf32> to vector<1x1x1xf32>
    %44 = vector.extract %43[0, 0, 0] : f32 from vector<1x1x1xf32>
    %c0_15 = arith.constant 0 : index
    %c0_16 = arith.constant 0 : index
    %c0_17 = arith.constant 0 : index
    %45 = vector.load %arg7[%c0_15, %c0_16, %c0_17] : memref<1x8x128xf32, #tpu.memory_space<vmem>>, vector<1x8x128xf32>
    %46 = vector.shape_cast %45 : vector<1x8x128xf32> to vector<8x128xf32>
    %c0_18 = arith.constant 0 : index
    %c0_19 = arith.constant 0 : index
    %c0_20 = arith.constant 0 : index
    %47 = vector.load %arg8[%c0_18, %c0_19, %c0_20] : memref<1x8x128xf32, #tpu.memory_space<vmem>>, vector<1x8x128xf32>
    %48 = vector.shape_cast %47 : vector<1x8x128xf32> to vector<8x128xf32>
    %49 = arith.subf %46, %48 : vector<8x128xf32>
    %50 = arith.mulf %49, %49 : vector<8x128xf32>
    %51 = vector.shape_cast %50 : vector<8x128xf32> to vector<1x8x128xf32>
    %cst_21 = arith.constant dense<0.000000e+00> : vector<1xf32>
    %52 = vector.multi_reduction <add>, %51, %cst_21 [1, 2] : vector<1x8x128xf32> to vector<1xf32>
    %53 = vector.shape_cast %52 : vector<1xf32> to vector<1x1x1xf32>
    %54 = vector.extract %53[0, 0, 0] : f32 from vector<1x1x1xf32>
    %55 = tpu.iota {dimensions = array<i32: 1>} : vector<1x128xi32>
    %c0_i32 = arith.constant 0 : i32
    %56 = vector.broadcast %c0_i32 : i32 to vector<1x128xi32>
    %57 = arith.cmpi eq, %55, %56 : vector<1x128xi32>
    %cst_22 = arith.constant 0.000000e+00 : f32
    %58 = vector.broadcast %44 : f32 to vector<1x128xf32>
    %59 = vector.broadcast %cst_22 : f32 to vector<1x128xf32>
    %60 = arith.select %57, %58, %59 : vector<1x128xi1>, vector<1x128xf32>
    %c3_i32 = arith.constant 3 : i32
    %61 = vector.broadcast %c3_i32 : i32 to vector<1x128xi32>
    %62 = arith.cmpi eq, %55, %61 : vector<1x128xi32>
    %cst_23 = arith.constant 0.000000e+00 : f32
    %63 = vector.broadcast %54 : f32 to vector<1x128xf32>
    %64 = vector.broadcast %cst_23 : f32 to vector<1x128xf32>
    %65 = arith.select %62, %63, %64 : vector<1x128xi1>, vector<1x128xf32>
    %66 = arith.addf %60, %65 : vector<1x128xf32>
    %c0_i32_24 = arith.constant 0 : i32
    %67 = arith.cmpi eq, %arg1, %c0_i32_24 : i32
    %68 = arith.extui %67 : i1 to i32
    %c0_i32_25 = arith.constant 0 : i32
    %69 = arith.cmpi ne, %68, %c0_i32_25 : i32
    scf.if %69 {
      %c0_28 = arith.constant 0 : index
      %c0_29 = arith.constant 0 : index
      %c0_30 = arith.constant 0 : index
      %73 = vector.load %arg6[%c0_28, %c0_29, %c0_30] : memref<1x1x128xf32, #tpu.memory_space<vmem>>, vector<1x1x128xf32>
      %74 = vector.shape_cast %73 : vector<1x1x128xf32> to vector<1x128xf32>
      %c0_31 = arith.constant 0 : index
      %c0_32 = arith.constant 0 : index
      %c0_33 = arith.constant 0 : index
      %75 = vector.load %arg4[%c0_31, %c0_32, %c0_33] : memref<1x8x128xf32, #tpu.memory_space<vmem>>, vector<1x8x128xf32>
      %76 = vector.shape_cast %75 : vector<1x8x128xf32> to vector<8x128xf32>
      %77 = vector.extract_strided_slice %76 {offsets = [0, 0], sizes = [4, 128], strides = [1, 1]} : vector<8x128xf32> to vector<4x128xf32>
      %78 = vector.extract_strided_slice %76 {offsets = [4, 0], sizes = [4, 128], strides = [1, 1]} : vector<8x128xf32> to vector<4x128xf32>
      %79 = arith.subf %77, %78 : vector<4x128xf32>
      %80 = math.absf %79 : vector<4x128xf32>
      %81 = vector.broadcast %74 : vector<1x128xf32> to vector<4x128xf32>
      %82 = arith.mulf %80, %81 : vector<4x128xf32>
      %83 = vector.shape_cast %82 : vector<4x128xf32> to vector<1x4x128xf32>
      %cst_34 = arith.constant dense<0.000000e+00> : vector<1xf32>
      %84 = vector.multi_reduction <add>, %83, %cst_34 [1, 2] : vector<1x4x128xf32> to vector<1xf32>
      %85 = vector.shape_cast %84 : vector<1xf32> to vector<1x1x1xf32>
      %86 = vector.extract %85[0, 0, 0] : f32 from vector<1x1x1xf32>
      %c0_35 = arith.constant 0 : index
      %c0_36 = arith.constant 0 : index
      %c0_37 = arith.constant 0 : index
      %87 = vector.load %arg5[%c0_35, %c0_36, %c0_37] : memref<1x8x128xf32, #tpu.memory_space<vmem>>, vector<1x8x128xf32>
      %88 = vector.shape_cast %87 : vector<1x8x128xf32> to vector<8x128xf32>
      %89 = vector.extract_strided_slice %88 {offsets = [0, 0], sizes = [1, 128], strides = [1, 1]} : vector<8x128xf32> to vector<1x128xf32>
      %90 = vector.extract_strided_slice %88 {offsets = [1, 0], sizes = [1, 128], strides = [1, 1]} : vector<8x128xf32> to vector<1x128xf32>
      %91 = vector.extract_strided_slice %88 {offsets = [2, 0], sizes = [1, 128], strides = [1, 1]} : vector<8x128xf32> to vector<1x128xf32>
      %92 = vector.extract_strided_slice %88 {offsets = [3, 0], sizes = [1, 128], strides = [1, 1]} : vector<8x128xf32> to vector<1x128xf32>
      %93 = vector.extract_strided_slice %88 {offsets = [4, 0], sizes = [1, 128], strides = [1, 1]} : vector<8x128xf32> to vector<1x128xf32>
      %94 = vector.extract_strided_slice %88 {offsets = [5, 0], sizes = [1, 128], strides = [1, 1]} : vector<8x128xf32> to vector<1x128xf32>
      %95 = vector.extract_strided_slice %88 {offsets = [6, 0], sizes = [1, 128], strides = [1, 1]} : vector<8x128xf32> to vector<1x128xf32>
      %96 = vector.extract_strided_slice %88 {offsets = [7, 0], sizes = [1, 128], strides = [1, 1]} : vector<8x128xf32> to vector<1x128xf32>
      %97 = arith.subf %91, %89 : vector<1x128xf32>
      %98 = arith.subf %92, %90 : vector<1x128xf32>
      %99 = arith.mulf %97, %98 : vector<1x128xf32>
      %100 = arith.subf %95, %93 : vector<1x128xf32>
      %101 = arith.subf %96, %94 : vector<1x128xf32>
      %102 = arith.mulf %100, %101 : vector<1x128xf32>
      %103 = arith.minimumf %91, %95 : vector<1x128xf32>
      %104 = arith.maximumf %89, %93 : vector<1x128xf32>
      %105 = arith.subf %103, %104 : vector<1x128xf32>
      %cst_38 = arith.constant 0.000000e+00 : f32
      %106 = vector.broadcast %cst_38 : f32 to vector<1x128xf32>
      %107 = arith.maximumf %105, %106 : vector<1x128xf32>
      %108 = arith.minimumf %92, %96 : vector<1x128xf32>
      %109 = arith.maximumf %90, %94 : vector<1x128xf32>
      %110 = arith.subf %108, %109 : vector<1x128xf32>
      %cst_39 = arith.constant 0.000000e+00 : f32
      %111 = vector.broadcast %cst_39 : f32 to vector<1x128xf32>
      %112 = arith.maximumf %110, %111 : vector<1x128xf32>
      %113 = arith.mulf %107, %112 : vector<1x128xf32>
      %114 = arith.addf %99, %102 : vector<1x128xf32>
      %115 = arith.subf %114, %113 : vector<1x128xf32>
      %cst_40 = arith.constant 9.99999997E-7 : f32
      %116 = vector.broadcast %cst_40 : f32 to vector<1x128xf32>
      %117 = arith.maximumf %115, %116 : vector<1x128xf32>
      %118 = arith.maximumf %91, %95 : vector<1x128xf32>
      %119 = arith.minimumf %89, %93 : vector<1x128xf32>
      %120 = arith.subf %118, %119 : vector<1x128xf32>
      %cst_41 = arith.constant 0.000000e+00 : f32
      %121 = vector.broadcast %cst_41 : f32 to vector<1x128xf32>
      %122 = arith.maximumf %120, %121 : vector<1x128xf32>
      %123 = arith.maximumf %92, %96 : vector<1x128xf32>
      %124 = arith.minimumf %90, %94 : vector<1x128xf32>
      %125 = arith.subf %123, %124 : vector<1x128xf32>
      %cst_42 = arith.constant 0.000000e+00 : f32
      %126 = vector.broadcast %cst_42 : f32 to vector<1x128xf32>
      %127 = arith.maximumf %125, %126 : vector<1x128xf32>
      %128 = arith.mulf %122, %127 : vector<1x128xf32>
      %cst_43 = arith.constant 9.99999997E-7 : f32
      %129 = vector.broadcast %cst_43 : f32 to vector<1x128xf32>
      %130 = arith.maximumf %128, %129 : vector<1x128xf32>
      %131 = arith.divf %113, %117 : vector<1x128xf32>
      %132 = arith.subf %130, %117 : vector<1x128xf32>
      %133 = arith.divf %132, %130 : vector<1x128xf32>
      %134 = arith.subf %131, %133 : vector<1x128xf32>
      %cst_44 = arith.constant 1.000000e+00 : f32
      %135 = vector.broadcast %cst_44 : f32 to vector<1x128xf32>
      %136 = arith.subf %135, %134 : vector<1x128xf32>
      %137 = arith.mulf %136, %74 : vector<1x128xf32>
      %138 = vector.shape_cast %137 : vector<1x128xf32> to vector<1x1x128xf32>
      %cst_45 = arith.constant dense<0.000000e+00> : vector<1xf32>
      %139 = vector.multi_reduction <add>, %138, %cst_45 [1, 2] : vector<1x1x128xf32> to vector<1xf32>
      %140 = vector.shape_cast %139 : vector<1xf32> to vector<1x1x1xf32>
      %141 = vector.extract %140[0, 0, 0] : f32 from vector<1x1x1xf32>
      %c1_i32 = arith.constant 1 : i32
      %142 = vector.broadcast %c1_i32 : i32 to vector<1x128xi32>
      %143 = arith.cmpi eq, %55, %142 : vector<1x128xi32>
      %cst_46 = arith.constant 0.000000e+00 : f32
      %144 = vector.broadcast %86 : f32 to vector<1x128xf32>
      %145 = vector.broadcast %cst_46 : f32 to vector<1x128xf32>
      %146 = arith.select %143, %144, %145 : vector<1x128xi1>, vector<1x128xf32>
      %147 = arith.addf %66, %146 : vector<1x128xf32>
      %c2_i32 = arith.constant 2 : i32
      %148 = vector.broadcast %c2_i32 : i32 to vector<1x128xi32>
      %149 = arith.cmpi eq, %55, %148 : vector<1x128xi32>
      %cst_47 = arith.constant 0.000000e+00 : f32
      %150 = vector.broadcast %141 : f32 to vector<1x128xf32>
      %151 = vector.broadcast %cst_47 : f32 to vector<1x128xf32>
      %152 = arith.select %149, %150, %151 : vector<1x128xi1>, vector<1x128xf32>
      %153 = arith.addf %147, %152 : vector<1x128xf32>
      %c0_48 = arith.constant 0 : index
      %c0_49 = arith.constant 0 : index
      %c0_50 = arith.constant 0 : index
      %154 = vector.load %arg9[%c0_48, %c0_49, %c0_50] : memref<1x1x128xf32, #tpu.memory_space<vmem>>, vector<1x1x128xf32>
      %155 = vector.shape_cast %154 : vector<1x1x128xf32> to vector<1x128xf32>
      %156 = vector.shape_cast %153 : vector<1x128xf32> to vector<1x1x128xf32>
      tpu.vector_store %arg9[%c0_48, %c0_49, %c0_50], %156 {strides = array<i32>} : memref<1x1x128xf32, #tpu.memory_space<vmem>>, vector<1x1x128xf32>,
    } else {
    }
    %c0_i32_26 = arith.constant 0 : i32
    %70 = arith.cmpi sgt, %arg1, %c0_i32_26 : i32
    %71 = arith.extui %70 : i1 to i32
    %c0_i32_27 = arith.constant 0 : i32
    %72 = arith.cmpi ne, %71, %c0_i32_27 : i32
    scf.if %72 {
      %c0_28 = arith.constant 0 : index
      %c0_29 = arith.constant 0 : index
      %c0_30 = arith.constant 0 : index
      %73 = vector.load %arg9[%c0_28, %c0_29, %c0_30] : memref<1x1x128xf32, #tpu.memory_space<vmem>>, vector<1x1x128xf32>
      %74 = vector.shape_cast %73 : vector<1x1x128xf32> to vector<1x128xf32>
      %75 = arith.addf %74, %66 : vector<1x128xf32>
      %c0_31 = arith.constant 0 : index
      %c0_32 = arith.constant 0 : index
      %c0_33 = arith.constant 0 : index
      %76 = vector.load %arg9[%c0_31, %c0_32, %c0_33] : memref<1x1x128xf32, #tpu.memory_space<vmem>>, vector<1x1x128xf32>
      %77 = vector.shape_cast %76 : vector<1x1x128xf32> to vector<1x128xf32>
      %78 = vector.shape_cast %75 : vector<1x128xf32> to vector<1x1x128xf32>
      tpu.vector_store %arg9[%c0_31, %c0_32, %c0_33], %78 {strides = array<i32>} : memref<1x1x128xf32, #tpu.memory_space<vmem>>, vector<1x1x128xf32>,
    } else {
    }
    return
  }
  func.func @transform_0(%arg0: i32, %arg1: i32) -> (i32, i32, i32) {
    %c0_i32 = arith.constant 0 : i32
    %c0_i32_0 = arith.constant 0 : i32
    return %arg0, %arg1, %c0_i32 : i32, i32, i32
  }
  func.func @transform_1(%arg0: i32, %arg1: i32) -> (i32, i32, i32) {
    %c0_i32 = arith.constant 0 : i32
    %c0_i32_0 = arith.constant 0 : i32
    %c0_i32_1 = arith.constant 0 : i32
    return %c0_i32, %arg1, %c0_i32_0 : i32, i32, i32
  }
  func.func @transform_2(%arg0: i32, %arg1: i32) -> (i32, i32, i32) {
    %c0_i32 = arith.constant 0 : i32
    %c0_i32_0 = arith.constant 0 : i32
    %c0_i32_1 = arith.constant 0 : i32
    return %arg0, %c0_i32, %c0_i32_0 : i32, i32, i32
  }
  func.func @transform_3(%arg0: i32, %arg1: i32) -> (i32, i32, i32) {
    %c0_i32 = arith.constant 0 : i32
    %c0_i32_0 = arith.constant 0 : i32
    %c0_i32_1 = arith.constant 0 : i32
    return %arg0, %c0_i32, %c0_i32_0 : i32, i32, i32
  }
  func.func @transform_4(%arg0: i32, %arg1: i32) -> (i32, i32, i32) {
    %c0_i32 = arith.constant 0 : i32
    %c0_i32_0 = arith.constant 0 : i32
    %c0_i32_1 = arith.constant 0 : i32
    %c0_i32_2 = arith.constant 0 : i32
    return %c0_i32, %c0_i32_0, %c0_i32_1 : i32, i32, i32
  }
  func.func @transform_5(%arg0: i32, %arg1: i32) -> (i32, i32, i32) {
    %c0_i32 = arith.constant 0 : i32
    %c0_i32_0 = arith.constant 0 : i32
    return %arg0, %arg1, %c0_i32 : i32, i32, i32
  }
  func.func @transform_6(%arg0: i32, %arg1: i32) -> (i32, i32, i32) {
    %c0_i32 = arith.constant 0 : i32
    %c0_i32_0 = arith.constant 0 : i32
    return %arg0, %arg1, %c0_i32 : i32, i32, i32
  }
  func.func @transform_7(%arg0: i32, %arg1: i32) -> (i32, i32, i32) {
    %c0_i32 = arith.constant 0 : i32
    %c0_i32_0 = arith.constant 0 : i32
    %c0_i32_1 = arith.constant 0 : i32
    return %arg0, %c0_i32, %c0_i32_0 : i32, i32, i32
  }
}

</mosaic_0001>

<llo_original>
// kernel: tpu_custom_call.1
$region0: #{tpu_custom_call.1}
  #allocation0 [shape = 'u32[]', space=smem, size = 0x4, offset = 0x4, fixed_abs, tag = 'smem constant byte address 0x4 - core index']
  #allocation1 [shape = 'u32[144,128]{1,0:T(1,128)}', space=vmem, size = 0x12000, scoped, tag = 'internal scratch']
  %s0 = inlined_call_operand.hbm [shape: bf16[2,16,128], index: 0, kind: input, shape index: {}]
  %s1 = inlined_call_operand.hbm [shape: bf16[1,16,128], index: 1, kind: input, shape index: {}]
  %s2 = inlined_call_operand.hbm [shape: f32[2,8,128], index: 2, kind: input, shape index: {}]
  %s3 = inlined_call_operand.hbm [shape: f32[2,8,128], index: 3, kind: input, shape index: {}]
  %s4 = inlined_call_operand.vmem [shape: f32[1,1,128], index: 4, kind: input, shape index: {}]
  %s5 = inlined_call_operand.hbm [shape: f32[2,8,128], index: 5, kind: input, shape index: {}]
  %s6 = inlined_call_operand.hbm [shape: f32[2,8,128], index: 6, kind: input, shape index: {}]
  %s7 = inlined_call_operand.hbm [shape: f32[2,1,128], index: 7, kind: output, shape index: {}]
  %s8 = sld [smem:[#allocation0]]
  $region93: #{tpu_custom_call.1} parent=0
    _
  %s10 = ssub.s32 1, %s8
  %s11 = scalar_select 0, %s10, %s8
  $region1: #{tpu_custom_call.1} parent=0
    #allocation2 [shape = 'u8[8192]{0}', space=vmem, size = 0x2000, scoped, tag = 'input window, operand 0']
    #allocation3 [shape = 's32[2]{0}', space=sflag, size = 0x8, scoped, tag = 'scoped memory for tpu_custom_call.1']
    #allocation4 [shape = 's32[2]{0}', space=sflag, size = 0x8, scoped, tag = 'scoped memory for tpu_custom_call.1']
    #allocation5 [shape = 'u8[4096]{0}', space=vmem, size = 0x1000, scoped, tag = 'input window, operand 1, single buffered']
    #allocation6 [shape = 's32[1]{0}', space=sflag, size = 0x4, scoped, tag = 'scoped memory for tpu_custom_call.1']
    #allocation7 [shape = 'u8[8192]{0}', space=vmem, size = 0x2000, scoped, tag = 'input window, operand 2']
    #allocation8 [shape = 'u8[8192]{0}', space=vmem, size = 0x2000, scoped, tag = 'input window, operand 3']
    #allocation9 [shape = 'u8[8192]{0}', space=vmem, size = 0x2000, scoped, tag = 'input window, operand 5']
    #allocation10 [shape = 'u8[8192]{0}', space=vmem, size = 0x2000, scoped, tag = 'input window, operand 6']
    #allocation11 [shape = 'u8[1024]{0}', space=vmem, size = 0x400, scoped, tag = 'output window, operand 0']
    %12 = vsyncpa [#allocation3], 0
    %s13 = scalar_lea.sflag [#allocation3], 1
    %14 = vsyncpa %s13, 0
    %15 = vsyncpa [#allocation6], 0
    %16 = vsyncpa [#allocation4], 0
    %s17 = scalar_lea.sflag [#allocation4], 1
    %18 = vsyncpa %s17, 0
    loop: start=0, step=1, limit=4
    $region2: #{tpu_custom_call.1} parent=1 // loop_pre_header
      _
    $region3: #{tpu_custom_call.1} parent=1 // loop_header
      %s20 = sphi 0, %s24
      %p21 = scmp.ge.s32.totalorder %s20, 4
      %s27 = sphi 0, %s39
      %s28 = sphi 0, %s35
      %s29 = sphi 0, %s27
      %s30 = sphi 0, %s28
      %s31 = sphi 0, %s29
      %s32 = sphi 0, %s30
      %s44 = sphi 0, %s46
      %s47 = sphi 0, %s44
      %s48 = sphi 0, %s47
      %s64 = sphi 0, %s48
      %s70 = sphi 0, %s72
      %s73 = sphi 0, %s70
      %s74 = sphi 0, %s73
      %s90 = sphi 0, %s74
      %s96 = sphi 0, %s98
      %s99 = sphi 0, %s96
      %s100 = sphi 0, %s99
      %s116 = sphi 0, %s100
      %s122 = sphi 0, %s124
      %s125 = sphi 0, %s122
      %s126 = sphi 0, %s125
      %s142 = sphi 0, %s126
      %s146 = sphi 0, %s146
      %s148 = sphi 0, %s146
      %s149 = sphi 0, %s148
      %s163 = sphi 0, %s149
      %s171 = sphi 0, %s173
      %s174 = sphi 0, %s171
      %s175 = sphi 0, %s174
      %s191 = sphi 0, %s175
      %s199 = sphi 0, %s201
      %s202 = sphi 0, %s199
      %s203 = sphi 0, %s202
      %s219 = sphi 0, %s203
      %s225 = sphi 0, %s227
      %s228 = sphi 0, %s225
      %s229 = sphi 0, %s228
      %s245 = sphi 0, %s229
    $region4: #{tpu_custom_call.1} parent=1 // loop_header_branch
      %23 = sbr.rel (%p21) target = $region8
    $region5: #{tpu_custom_call.1} parent=1 // loop_body
      %s25 = ssub.s32 %s20, 1
      %s26 = ssub.s32 %s20, 2
      %s33 = sadd.s32 1, %s28
      %p34 = scmp.ge.s32.totalorder %s33, 1
      %s35 = scalar_select %p34, 0, %s33
      %s36 = sadd.s32 1, %s27
      %s37 = scalar_select %p34, %s36, %s27
      %p38 = scmp.ge.s32.totalorder %s37, 2
      %s39 = scalar_select %p38, 0, %s37
      %s40 = ssub.s32 %s27, %s39
      %s41 = ssub.s32 %s28, %s35
      %s42 = sor.u32 %s40, %s41
      %p43 = scmp.eq.s32.totalorder %s42, 0
      %s45 = sadd.s32 %s44, 1
      %s46 = scalar_select %p43, %s44, %s45
      %p49 = pneg %p43
      %p50 = scmp.eq.s32.totalorder %s20, 1
      %p51 = por %p49, %p50
      %p52 = scmp.ne.s32.totalorder %s44, %s47
      %p53 = scmp.eq.s32.totalorder %s20, 0
      %p54 = por %p52, %p53
      %p55 = scmp.ne.s32.totalorder %s44, %s47
      %p56 = scmp.eq.s32.totalorder %s25, 1
      %p57 = por %p55, %p56
      %p58 = scmp.ne.s32.totalorder %s47, %s48
      %p59 = scmp.eq.s32.totalorder %s25, 0
      %p60 = por %p58, %p59
      %p61 = scmp.ne.s32.totalorder %s47, %s48
      %p62 = scmp.eq.s32.totalorder %s26, 1
      %p63 = por %p61, %p62
      %p65 = scmp.ne.s32.totalorder %s48, %s64
      %p66 = scmp.eq.s32.totalorder %s26, 0
      %p67 = por %p65, %p66
      %s68 = ssub.s32 %s28, %s35
      %p69 = scmp.eq.s32.totalorder %s68, 0
      %s71 = sadd.s32 %s70, 1
      %s72 = scalar_select %p69, %s70, %s71
      %p75 = pneg %p69
      %p76 = scmp.eq.s32.totalorder %s20, 1
      %p77 = por %p75, %p76
      %p78 = scmp.ne.s32.totalorder %s70, %s73
      %p79 = scmp.eq.s32.totalorder %s20, 0
      %p80 = por %p78, %p79
      %p81 = scmp.ne.s32.totalorder %s70, %s73
      %p82 = scmp.eq.s32.totalorder %s25, 1
      %p83 = por %p81, %p82
      %p84 = scmp.ne.s32.totalorder %s73, %s74
      %p85 = scmp.eq.s32.totalorder %s25, 0
      %p86 = por %p84, %p85
      %p87 = scmp.ne.s32.totalorder %s73, %s74
      %p88 = scmp.eq.s32.totalorder %s26, 1
      %p89 = por %p87, %p88
      %p91 = scmp.ne.s32.totalorder %s74, %s90
      %p92 = scmp.eq.s32.totalorder %s26, 0
      %p93 = por %p91, %p92
      %s94 = ssub.s32 %s27, %s39
      %p95 = scmp.eq.s32.totalorder %s94, 0
      %s97 = sadd.s32 %s96, 1
      %s98 = scalar_select %p95, %s96, %s97
      %p101 = pneg %p95
      %p102 = scmp.eq.s32.totalorder %s20, 1
      %p103 = por %p101, %p102
      %p104 = scmp.ne.s32.totalorder %s96, %s99
      %p105 = scmp.eq.s32.totalorder %s20, 0
      %p106 = por %p104, %p105
      %p107 = scmp.ne.s32.totalorder %s96, %s99
      %p108 = scmp.eq.s32.totalorder %s25, 1
      %p109 = por %p107, %p108
      %p110 = scmp.ne.s32.totalorder %s99, %s100
      %p111 = scmp.eq.s32.totalorder %s25, 0
      %p112 = por %p110, %p111
      %p113 = scmp.ne.s32.totalorder %s99, %s100
      %p114 = scmp.eq.s32.totalorder %s26, 1
      %p115 = por %p113, %p114
      %p117 = scmp.ne.s32.totalorder %s100, %s116
      %p118 = scmp.eq.s32.totalorder %s26, 0
      %p119 = por %p117, %p118
      %s120 = ssub.s32 %s27, %s39
      %p121 = scmp.eq.s32.totalorder %s120, 0
      %s123 = sadd.s32 %s122, 1
      %s124 = scalar_select %p121, %s122, %s123
      %p127 = pneg %p121
      %p128 = scmp.eq.s32.totalorder %s20, 1
      %p129 = por %p127, %p128
      %p130 = scmp.ne.s32.totalorder %s122, %s125
      %p131 = scmp.eq.s32.totalorder %s20, 0
      %p132 = por %p130, %p131
      %p133 = scmp.ne.s32.totalorder %s122, %s125
      %p134 = scmp.eq.s32.totalorder %s25, 1
      %p135 = por %p133, %p134
      %p136 = scmp.ne.s32.totalorder %s125, %s126
      %p137 = scmp.eq.s32.totalorder %s25, 0
      %p138 = por %p136, %p137
      %p139 = scmp.ne.s32.totalorder %s125, %s126
      %p140 = scmp.eq.s32.totalorder %s26, 1
      %p141 = por %p139, %p140
      %p143 = scmp.ne.s32.totalorder %s126, %s142
      %p144 = scmp.eq.s32.totalorder %s26, 0
      %p145 = por %p143, %p144
      %s147 = sadd.s32 %s146, 1
      %p150 = scmp.eq.s32.totalorder %s20, 1
      %p151 = scmp.ne.s32.totalorder %s146, %s148
      %p152 = scmp.eq.s32.totalorder %s20, 0
      %p153 = por %p151, %p152
      %p154 = scmp.ne.s32.totalorder %s146, %s148
      %p155 = scmp.eq.s32.totalorder %s25, 1
      %p156 = por %p154, %p155
      %p157 = scmp.ne.s32.totalorder %s148, %s149
      %p158 = scmp.eq.s32.totalorder %s25, 0
      %p159 = por %p157, %p158
      %p160 = scmp.ne.s32.totalorder %s148, %s149
      %p161 = scmp.eq.s32.totalorder %s26, 1
      %p162 = por %p160, %p161
      %p164 = scmp.ne.s32.totalorder %s149, %s163
      %p165 = scmp.eq.s32.totalorder %s26, 0
      %p166 = por %p164, %p165
      %s167 = ssub.s32 %s27, %s39
      %s168 = ssub.s32 %s28, %s35
      %s169 = sor.u32 %s167, %s168
      %p170 = scmp.eq.s32.totalorder %s169, 0
      %s172 = sadd.s32 %s171, 1
      %s173 = scalar_select %p170, %s171, %s172
      %p176 = pneg %p170
      %p177 = scmp.eq.s32.totalorder %s20, 1
      %p178 = por %p176, %p177
      %p179 = scmp.ne.s32.totalorder %s171, %s174
      %p180 = scmp.eq.s32.totalorder %s20, 0
      %p181 = por %p179, %p180
      %p182 = scmp.ne.s32.totalorder %s171, %s174
      %p183 = scmp.eq.s32.totalorder %s25, 1
      %p184 = por %p182, %p183
      %p185 = scmp.ne.s32.totalorder %s174, %s175
      %p186 = scmp.eq.s32.totalorder %s25, 0
      %p187 = por %p185, %p186
      %p188 = scmp.ne.s32.totalorder %s174, %s175
      %p189 = scmp.eq.s32.totalorder %s26, 1
      %p190 = por %p188, %p189
      %p192 = scmp.ne.s32.totalorder %s175, %s191
      %p193 = scmp.eq.s32.totalorder %s26, 0
      %p194 = por %p192, %p193
      %s195 = ssub.s32 %s27, %s39
      %s196 = ssub.s32 %s28, %s35
      %s197 = sor.u32 %s195, %s196
      %p198 = scmp.eq.s32.totalorder %s197, 0
      %s200 = sadd.s32 %s199, 1
      %s201 = scalar_select %p198, %s199, %s200
      %p204 = pneg %p198
      %p205 = scmp.eq.s32.totalorder %s20, 1
      %p206 = por %p204, %p205
      %p207 = scmp.ne.s32.totalorder %s199, %s202
      %p208 = scmp.eq.s32.totalorder %s20, 0
      %p209 = por %p207, %p208
      %p210 = scmp.ne.s32.totalorder %s199, %s202
      %p211 = scmp.eq.s32.totalorder %s25, 1
      %p212 = por %p210, %p211
      %p213 = scmp.ne.s32.totalorder %s202, %s203
      %p214 = scmp.eq.s32.totalorder %s25, 0
      %p215 = por %p213, %p214
      %p216 = scmp.ne.s32.totalorder %s202, %s203
      %p217 = scmp.eq.s32.totalorder %s26, 1
      %p218 = por %p216, %p217
      %p220 = scmp.ne.s32.totalorder %s203, %s219
      %p221 = scmp.eq.s32.totalorder %s26, 0
      %p222 = por %p220, %p221
      %s223 = ssub.s32 %s27, %s39
      %p224 = scmp.eq.s32.totalorder %s223, 0
      %s226 = sadd.s32 %s225, 1
      %s227 = scalar_select %p224, %s225, %s226
      %p230 = pneg %p224
      %p231 = scmp.eq.s32.totalorder %s20, 1
      %p232 = por %p230, %p231
      %p233 = scmp.ne.s32.totalorder %s225, %s228
      %p234 = scmp.eq.s32.totalorder %s20, 0
      %p235 = por %p233, %p234
      %p236 = scmp.ne.s32.totalorder %s225, %s228
      %p237 = scmp.eq.s32.totalorder %s25, 1
      %p238 = por %p236, %p237
      %p239 = scmp.ne.s32.totalorder %s228, %s229
      %p240 = scmp.eq.s32.totalorder %s25, 0
      %p241 = por %p239, %p240
      %p242 = scmp.ne.s32.totalorder %s228, %s229
      %p243 = scmp.eq.s32.totalorder %s26, 1
      %p244 = por %p242, %p243
      %p246 = scmp.ne.s32.totalorder %s229, %s245
      %p247 = scmp.eq.s32.totalorder %s26, 0
      %p248 = por %p246, %p247
      %p249 = scmp.le.s32.totalorder 1, %s20
      %p250 = scmp.lt.s32.totalorder %s20, 3
      %p251 = pnand %p249, %p250
      %p252 = pneg %p251
      // Predicated region
      $region9: #{tpu_custom_call.1} parent=5 // pred_check
        _
      $region10: #{tpu_custom_call.1} parent=5 // pred_check_branch
        %254 = sbr.rel (%p251) target = $region12
      $region11: #{tpu_custom_call.1} parent=5 // pred_region
        %s255 = ssub.s32 %s20, 1
        // Predicated region
        $region13: #{tpu_custom_call.1} parent=11 // pred_check
          %p256 = pneg %p86
        $region14: #{tpu_custom_call.1} parent=11 // pred_check_branch
          %258 = sbr.rel (%p256) target = $region16
        $region15: #{tpu_custom_call.1} parent=11 // pred_region
          %s259 = smul.u32 2, %s30
          %s261 = ssub.s32 128, 128
          %262 = vsyncadd [#allocation6], %s261
          %s263 = smul.addr %s259, 64
          %s264 = scalar_lea.hbm %s1, %s263
          %s265 = sshll.u32 [#allocation5], 4
          %s266 = int_to_ptr.vmem [resolvable:$true] %s265
          %271 = dma.hbm_to_vmem [thread:$0]  %s264, 128, %s266, [#allocation6], 64, 64, 4
        $region16: #{tpu_custom_call.1} parent=11 // pred_fallthru
          _
        // Predicated region
        $region17: #{tpu_custom_call.1} parent=11 // pred_check
          %p272 = pneg %p159
        $region18: #{tpu_custom_call.1} parent=11 // pred_check_branch
          %274 = sbr.rel (%p272) target = $region20
        $region19: #{tpu_custom_call.1} parent=11 // pred_region
          _
        $region20: #{tpu_custom_call.1} parent=11 // pred_fallthru
          _
      $region12: #{tpu_custom_call.1} parent=5 // pred_fallthru
        _
      %p275 = scmp.lt.s32.totalorder %s20, 2
      // Predicated region
      $region21: #{tpu_custom_call.1} parent=5 // pred_check
        %p276 = pneg %p275
      $region22: #{tpu_custom_call.1} parent=5 // pred_check_branch
        %278 = sbr.rel (%p276) target = $region24
      $region23: #{tpu_custom_call.1} parent=5 // pred_region
        // Predicated region
        $region25: #{tpu_custom_call.1} parent=23 // pred_check
          %p279 = pneg %p54
        $region26: #{tpu_custom_call.1} parent=23 // pred_check_branch
          %281 = sbr.rel (%p279) target = $region28
        $region27: #{tpu_custom_call.1} parent=23 // pred_region
          %s282 = sand.u32 %s20, 1
          %s283 = scalar_lea.sflag [#allocation3], %s282
          %s284 = sand.u32 %s44, 1
          %s285 = smul.addr %s284, 8
          %s286 = scalar_lea.vmem [#allocation2], %s285
          %s287 = smul.u32 2, %s28
          %s289 = ssub.s32 128, 128
          %290 = vsyncadd %s283, %s289
          %s291 = smul.addr %s27, 2
          %s292 = sadd.s32 %s287, %s291
          %s293 = smul.addr %s292, 64
          %s294 = scalar_lea.hbm %s0, %s293
          %s295 = sshll.u32 %s286, 4
          %s296 = int_to_ptr.vmem [resolvable:$true] %s295
          %301 = dma.hbm_to_vmem [thread:$0]  %s294, 128, %s296, %s283, 64, 64, 4
        $region28: #{tpu_custom_call.1} parent=23 // pred_fallthru
          _
        // Predicated region
        $region29: #{tpu_custom_call.1} parent=23 // pred_check
          %p302 = pneg %p106
        $region30: #{tpu_custom_call.1} parent=23 // pred_check_branch
          %304 = sbr.rel (%p302) target = $region32
        $region31: #{tpu_custom_call.1} parent=23 // pred_region
          %s305 = sand.u32 %s20, 1
          %s306 = scalar_lea.sflag [#allocation3], %s305
          %s307 = sand.u32 %s96, 1
          %s308 = smul.addr %s307, 8
          %s309 = scalar_lea.vmem [#allocation7], %s308
          %s311 = ssub.s32 128, 128
          %312 = vsyncadd %s306, %s311
          %s313 = smul.addr %s27, 128
          %s314 = scalar_lea.hbm %s2, %s313
          %s316 = sshll.u32 %s309, 4
          %s317 = int_to_ptr.vmem [resolvable:$true] %s316
          %319 = dma.hbm_to_vmem [thread:$0]  %s314, 128, %s317, %s306
        $region32: #{tpu_custom_call.1} parent=23 // pred_fallthru
          _
        // Predicated region
        $region33: #{tpu_custom_call.1} parent=23 // pred_check
          %p320 = pneg %p132
        $region34: #{tpu_custom_call.1} parent=23 // pred_check_branch
          %322 = sbr.rel (%p320) target = $region36
        $region35: #{tpu_custom_call.1} parent=23 // pred_region
          %s323 = sand.u32 %s20, 1
          %s324 = scalar_lea.sflag [#allocation3], %s323
          %s325 = sand.u32 %s122, 1
          %s326 = smul.addr %s325, 8
          %s327 = scalar_lea.vmem [#allocation8], %s326
          %s329 = ssub.s32 128, 128
          %330 = vsyncadd %s324, %s329
          %s331 = smul.addr %s27, 128
          %s332 = scalar_lea.hbm %s3, %s331
          %s334 = sshll.u32 %s327, 4
          %s335 = int_to_ptr.vmem [resolvable:$true] %s334
          %337 = dma.hbm_to_vmem [thread:$0]  %s332, 128, %s335, %s324
        $region36: #{tpu_custom_call.1} parent=23 // pred_fallthru
          _
        // Predicated region
        $region37: #{tpu_custom_call.1} parent=23 // pred_check
          %p338 = pneg %p181
        $region38: #{tpu_custom_call.1} parent=23 // pred_check_branch
          %340 = sbr.rel (%p338) target = $region40
        $region39: #{tpu_custom_call.1} parent=23 // pred_region
          %s341 = sand.u32 %s20, 1
          %s342 = scalar_lea.sflag [#allocation3], %s341
          %s343 = sand.u32 %s171, 1
          %s344 = smul.addr %s343, 8
          %s345 = scalar_lea.vmem [#allocation9], %s344
          %s347 = ssub.s32 128, 128
          %348 = vsyncadd %s342, %s347
          %s349 = sadd.s32 %s28, %s27
          %s350 = smul.addr %s349, 128
          %s351 = scalar_lea.hbm %s5, %s350
          %s353 = sshll.u32 %s345, 4
          %s354 = int_to_ptr.vmem [resolvable:$true] %s353
          %356 = dma.hbm_to_vmem [thread:$0]  %s351, 128, %s354, %s342
        $region40: #{tpu_custom_call.1} parent=23 // pred_fallthru
          _
        // Predicated region
        $region41: #{tpu_custom_call.1} parent=23 // pred_check
          %p357 = pneg %p209
        $region42: #{tpu_custom_call.1} parent=23 // pred_check_branch
          %359 = sbr.rel (%p357) target = $region44
        $region43: #{tpu_custom_call.1} parent=23 // pred_region
          %s360 = sand.u32 %s20, 1
          %s361 = scalar_lea.sflag [#allocation3], %s360
          %s362 = sand.u32 %s199, 1
          %s363 = smul.addr %s362, 8
          %s364 = scalar_lea.vmem [#allocation10], %s363
          %s366 = ssub.s32 128, 128
          %367 = vsyncadd %s361, %s366
          %s368 = sadd.s32 %s28, %s27
          %s369 = smul.addr %s368, 128
          %s370 = scalar_lea.hbm %s6, %s369
          %s372 = sshll.u32 %s364, 4
          %s373 = int_to_ptr.vmem [resolvable:$true] %s372
          %375 = dma.hbm_to_vmem [thread:$0]  %s370, 128, %s373, %s361
        $region44: #{tpu_custom_call.1} parent=23 // pred_fallthru
          _
      $region24: #{tpu_custom_call.1} parent=5 // pred_fallthru
        _
      %p376 = scmp.le.s32.totalorder 1, %s20
      %p377 = scmp.lt.s32.totalorder %s20, 3
      %p378 = pnand %p376, %p377
      %p379 = pneg %p378
      // Predicated region
      $region45: #{tpu_custom_call.1} parent=5 // pred_check
        _
      $region46: #{tpu_custom_call.1} parent=5 // pred_check_branch
        %381 = sbr.rel (%p378) target = $region48
      $region47: #{tpu_custom_call.1} parent=5 // pred_region
        %s382 = ssub.s32 %s20, 1
        %s383 = sand.u32 %s25, 1
        %s384 = scalar_lea.sflag [#allocation3], %s383
        %s385 = sand.u32 %s47, 1
        %s386 = smul.addr %s385, 8
        %s387 = scalar_lea.vmem [#allocation2], %s386
        // Predicated region
        $region49: #{tpu_custom_call.1} parent=47 // pred_check
          %p388 = pneg %p60
        $region50: #{tpu_custom_call.1} parent=47 // pred_check_branch
          %390 = sbr.rel (%p388) target = $region52
        $region51: #{tpu_custom_call.1} parent=47 // pred_region
          %391 = dma.done %s384, 128
        $region52: #{tpu_custom_call.1} parent=47 // pred_fallthru
          _
        // Predicated region
        $region53: #{tpu_custom_call.1} parent=47 // pred_check
          %p392 = pneg %p86
        $region54: #{tpu_custom_call.1} parent=47 // pred_check_branch
          %394 = sbr.rel (%p392) target = $region56
        $region55: #{tpu_custom_call.1} parent=47 // pred_region
          %395 = dma.done [#allocation6], 128
        $region56: #{tpu_custom_call.1} parent=47 // pred_fallthru
          _
        %s396 = sand.u32 %s25, 1
        %s397 = scalar_lea.sflag [#allocation3], %s396
        %s398 = sand.u32 %s99, 1
        %s399 = smul.addr %s398, 8
        %s400 = scalar_lea.vmem [#allocation7], %s399
        // Predicated region
        $region57: #{tpu_custom_call.1} parent=47 // pred_check
          %p401 = pneg %p112
        $region58: #{tpu_custom_call.1} parent=47 // pred_check_branch
          %403 = sbr.rel (%p401) target = $region60
        $region59: #{tpu_custom_call.1} parent=47 // pred_region
          %404 = dma.done %s397, 128
        $region60: #{tpu_custom_call.1} parent=47 // pred_fallthru
          _
        %s405 = sand.u32 %s25, 1
        %s406 = scalar_lea.sflag [#allocation3], %s405
        %s407 = sand.u32 %s125, 1
        %s408 = smul.addr %s407, 8
        %s409 = scalar_lea.vmem [#allocation8], %s408
        // Predicated region
        $region61: #{tpu_custom_call.1} parent=47 // pred_check
          %p410 = pneg %p138
        $region62: #{tpu_custom_call.1} parent=47 // pred_check_branch
          %412 = sbr.rel (%p410) target = $region64
        $region63: #{tpu_custom_call.1} parent=47 // pred_region
          %413 = dma.done %s406, 128
        $region64: #{tpu_custom_call.1} parent=47 // pred_fallthru
          _
        %s414 = sand.u32 %s25, 1
        %s415 = scalar_lea.sflag [#allocation3], %s414
        %s416 = sand.u32 %s174, 1
        %s417 = smul.addr %s416, 8
        %s418 = scalar_lea.vmem [#allocation9], %s417
        // Predicated region
        $region65: #{tpu_custom_call.1} parent=47 // pred_check
          %p419 = pneg %p187
        $region66: #{tpu_custom_call.1} parent=47 // pred_check_branch
          %421 = sbr.rel (%p419) target = $region68
        $region67: #{tpu_custom_call.1} parent=47 // pred_region
          %422 = dma.done %s415, 128
        $region68: #{tpu_custom_call.1} parent=47 // pred_fallthru
          _
        %s423 = sand.u32 %s25, 1
        %s424 = scalar_lea.sflag [#allocation3], %s423
        %s425 = sand.u32 %s202, 1
        %s426 = smul.addr %s425, 8
        %s427 = scalar_lea.vmem [#allocation10], %s426
        // Predicated region
        $region69: #{tpu_custom_call.1} parent=47 // pred_check
          %p428 = pneg %p215
        $region70: #{tpu_custom_call.1} parent=47 // pred_check_branch
          %430 = sbr.rel (%p428) target = $region72
        $region71: #{tpu_custom_call.1} parent=47 // pred_region
          %431 = dma.done %s424, 128
        $region72: #{tpu_custom_call.1} parent=47 // pred_fallthru
          _
        %s432 = sand.u32 %s25, 1
        %s433 = scalar_lea.sflag [#allocation3], %s432
        %s434 = sand.u32 %s47, 1
        %s435 = smul.addr %s434, 8
        %s436 = scalar_lea.vmem [#allocation2], %s435
        %p437 = pneg %p60
        %p438 = pneg %p57
        %p439 = pneg %p86
        %p440 = pneg %p83
        %s441 = sand.u32 %s25, 1
        %s442 = scalar_lea.sflag [#allocation3], %s441
        %s443 = sand.u32 %s99, 1
        %s444 = smul.addr %s443, 8
        %s445 = scalar_lea.vmem [#allocation7], %s444
        %p446 = pneg %p112
        %p447 = pneg %p109
        %s448 = sand.u32 %s25, 1
        %s449 = scalar_lea.sflag [#allocation3], %s448
        %s450 = sand.u32 %s125, 1
        %s451 = smul.addr %s450, 8
        %s452 = scalar_lea.vmem [#allocation8], %s451
        %p453 = pneg %p138
        %p454 = pneg %p135
        %p455 = pneg %p159
        %p456 = pneg %p156
        %s457 = sand.u32 %s25, 1
        %s458 = scalar_lea.sflag [#allocation3], %s457
        %s459 = sand.u32 %s174, 1
        %s460 = smul.addr %s459, 8
        %s461 = scalar_lea.vmem [#allocation9], %s460
        %p462 = pneg %p187
        %p463 = pneg %p184
        %s464 = sand.u32 %s25, 1
        %s465 = scalar_lea.sflag [#allocation3], %s464
        %s466 = sand.u32 %s202, 1
        %s467 = smul.addr %s466, 8
        %s468 = scalar_lea.vmem [#allocation10], %s467
        %p469 = pneg %p215
        %p470 = pneg %p212
        %p471 = pneg %p241
        %p472 = pneg %p238
        %s473 = sand.u32 %s228, 1
        %s474 = scalar_lea.sflag [#allocation4], %s473
        %s475 = sand.u32 %s228, 1
        %s476 = scalar_lea.vmem [#allocation11], %s475
        %s477 = smul.u32 2, %s30
        %s478 = smul.u32 2, %s30
        %v479 = vld [vmem:[%s387] sm:$0xf]
        %v480 = vld [vmem:[%s387 + $0x4] sm:$0xf]
        %v481 = vunpack.c.l.bf16 %v479
        %v482 = vunpack.c.l.bf16 %v480
        %v483 = vld [vmem:[#allocation5] sm:$0xf]
        %v484 = vld [vmem:[#allocation5 + $0x4] sm:$0xf]
        %v485 = vunpack.c.l.bf16 %v483
        %v486 = vunpack.c.l.bf16 %v484
        %v487 = vand.u32 2147483647, %v481
        %v488 = vand.u32 2147483647, %v482
        %v489 = vsub.f32 0.0, %v487
        %v490 = vsub.f32 0.0, %v488
        %v491 = vmul.f32 %v489, 1.442695
        %v492 = vpow.pop %v491
        %v493 = vmul.f32 %v490, 1.442695
        %v494 = vpow.pop %v493
        %v495 = vadd.f32 %v492, 1.0
        %v496 = vadd.f32 %v494, 1.0
        %v497 = vrcp.pop %v495
        %v498 = vmul.f32 1.0, %v497
        %v499 = vrcp.pop %v496
        %v500 = vmul.f32 1.0, %v499
        %vm501 = vcmp.ge.f32.partialorder %v481, 0.0
        %vm502 = vcmp.ge.f32.partialorder %v482, 0.0
        %v503 = vmul.f32 %v492, %v498
        %v504 = vmul.f32 %v494, %v500
        %v505 = vsel %vm501, %v498, %v503
        %v506 = vsel %vm502, %v500, %v504
        %v507 = vmax.f32 %v481, 0.0
        %v508 = vmax.f32 %v482, 0.0
        %v509 = vmul.f32 %v481, %v485
        %v510 = vmul.f32 %v482, %v486
        %v511 = vsub.f32 %v507, %v509
        %v512 = vsub.f32 %v508, %v510
        %v513 = vadd.f32 %v492, 1.0
        %v514 = vlog2.pop %v513
        %v515 = vmul.f32 %v514, 0.6931472
        %v516 = vmul.f32 -0.5, %v492
        %v517 = vadd.f32 %v516, 1.0
        %v518 = vmul.f32 %v517, %v492
        %v519 = vand.u32 2147483647, %v492
        %vm520 = vcmp.lt.f32.partialorder %v519, 0.0004427343
        %v521 = vsel %vm520, %v518, %v515
        %v522 = vadd.f32 %v494, 1.0
        %v523 = vlog2.pop %v522
        %v524 = vmul.f32 %v523, 0.6931472
        %v525 = vmul.f32 -0.5, %v494
        %v526 = vadd.f32 %v525, 1.0
        %v527 = vmul.f32 %v526, %v494
        %v528 = vand.u32 2147483647, %v494
        %vm529 = vcmp.lt.f32.partialorder %v528, 0.0004427343
        %v530 = vsel %vm529, %v527, %v524
        %v531 = vadd.f32 %v511, %v521
        %v532 = vadd.f32 %v512, %v530
        %v533 = vsub.f32 1.0, %v505
        %v534 = vsub.f32 1.0, %v506
        %v535 = vmul.f32 %v533, %v485
        %v536 = vmul.f32 %v534, %v486
        %v537 = vsub.f32 1.0, %v485
        %v538 = vsub.f32 1.0, %v486
        %v539 = vmul.f32 %v505, %v537
        %v540 = vmul.f32 %v506, %v538
        %v541 = vadd.f32 %v535, %v539
        %v542 = vadd.f32 %v536, %v540
        %v543 = vmul.f32 %v541, %v541
        %v544 = vmul.f32 %v542, %v542
        %v545 = vmul.f32 %v485, 0.25
        %v546 = vmul.f32 %v486, 0.25
        %v547 = vmul.f32 %v537, 0.75
        %v548 = vmul.f32 %v538, 0.75
        %v549 = vadd.f32 %v545, %v547
        %v550 = vadd.f32 %v546, %v548
        %v551 = vmul.f32 %v549, %v543
        %v552 = vmul.f32 %v550, %v544
        %v553 = vmul.f32 %v531, %v551
        %v554 = vmul.f32 %v532, %v552
        %v555 = vadd.f32 %v553, %v554
        %556 = vadd.xlane.f32.xlu0 %v555
        %v557 = vpop.xlane.xlu0 %556
        %v558 = vrot.slane %v557, 4
        %v559 = vadd.f32 %v557, %v558
        %v560 = vrot.slane %v559, 2
        %v561 = vadd.f32 %v559, %v560
        %v562 = vrot.slane %v561, 1
        %v563 = vadd.f32 %v561, %v562
        %s564 = vtos %v563
        %v565 = vld [vmem:[%s418] sm:$0xff]
        %v566 = vld [vmem:[%s427] sm:$0xff]
        %v567 = vsub.f32 %v565, %v566
        %v568 = vmul.f32 %v567, %v567
        %569 = vadd.xlane.f32.xlu0 %v568
        %v570 = vpop.xlane.xlu0 %569
        %v571 = vrot.slane %v570, 4
        %v572 = vadd.f32 %v570, %v571
        %v573 = vrot.slane %v572, 2
        %v574 = vadd.f32 %v572, %v573
        %v575 = vrot.slane %v574, 1
        %v576 = vadd.f32 %v574, %v575
        %s577 = vtos %v576
        %v578 = vlaneseq
        %v579 = vand.u32 %v578, 127
        %vm580 = vcmp.eq.s32.totalorder %v579, 0
        %v581 = vstv %s564
        %v582 = vsel %vm580, %v581, 0.0
        %vm583 = vcmp.eq.s32.totalorder %v579, 3
        %v584 = vstv %s577
        %v585 = vsel %vm583, %v584, 0.0
        %v586 = vadd.f32 %v582, %v585
        %p587 = scmp.eq.s32.totalorder %s30, 0
        // Predicated region
        $region73: #{tpu_custom_call.1} parent=47 // pred_check
          %p588 = pneg %p587
        $region74: #{tpu_custom_call.1} parent=47 // pred_check_branch
          %590 = sbr.rel (%p588) target = $region76
        $region75: #{tpu_custom_call.1} parent=47 // pred_region
          %v591 = vld [vmem:[%s4] sm:$0x1]
          %v592 = vld [vmem:[%s400] sm:$0xff]
          %v594 = vrot.slane %v592, 4
          %v596 = vsub.f32 %v592, %v594
          %v597 = vand.u32 2147483647, %v596
          %v599 = vlaneseq
          %v600 = vshrl.u32 %v599, 7
          %v601 = vsub.s32 0, %v600
          %v602 = vrot.slane %v591, %v601
          %v604 = vmul.f32 %v597, %v602
          %vm605 = vcmask 1043456
          %v606 = vsel %vm605, %v604, 0.0
          %607 = vadd.xlane.f32.xlu0 %v606
          %v608 = vpop.xlane.xlu0 %607
          %v609 = vrot.slane %v608, 4
          %v610 = vadd.f32 %v608, %v609
          %v611 = vrot.slane %v610, 2
          %v612 = vadd.f32 %v610, %v611
          %v613 = vrot.slane %v612, 1
          %v614 = vadd.f32 %v612, %v613
          %s615 = vtos %v614
          %v616 = vld [vmem:[%s409] sm:$0xff]
          %v618 = vrot.slane %v616, 6
          %v620 = vsub.f32 %v616, %v618
          %v622 = vrot.slane %v620, 1
          %v624 = vmul.f32 %v620, %v622
          %v625 = vrot.slane %v616, 4
          %v627 = vmin.f32 %v616, %v625
          %v628 = vmax.f32 %v616, %v625
          %v630 = vrot.slane %v628, 6
          %v632 = vsub.f32 %v627, %v630
          %v633 = vmax.f32 %v632, 0.0
          %v635 = vrot.slane %v633, 1
          %v637 = vmul.f32 %v633, %v635
          %v639 = vrot.slane %v624, 4
          %v641 = vadd.f32 %v624, %v639
          %v642 = vsub.f32 %v641, %v637
          %v643 = vmax.f32 %v642, 1e-06
          %v645 = vrot.slane %v627, 6
          %v647 = vsub.f32 %v628, %v645
          %v648 = vmax.f32 %v647, 0.0
          %v650 = vrot.slane %v648, 1
          %v652 = vmul.f32 %v648, %v650
          %v653 = vmax.f32 %v652, 1e-06
          %v654 = vrcp.pop %v643
          %v655 = vmul.f32 %v637, %v654
          %v656 = vsub.f32 %v653, %v643
          %v657 = vrcp.pop %v653
          %v658 = vmul.f32 %v656, %v657
          %v659 = vsub.f32 %v655, %v658
          %v660 = vsub.f32 1.0, %v659
          %v661 = vmul.f32 %v660, %v602
          %v663 = vrot.slane %v661, 2
          %vm665 = vcmask 1040384
          %v666 = vsel %vm665, %v663, 0.0
          %667 = vadd.xlane.f32.xlu0 %v666
          %v668 = vpop.xlane.xlu0 %667
          %v669 = vrot.slane %v668, 4
          %v670 = vadd.f32 %v668, %v669
          %v671 = vrot.slane %v670, 2
          %v672 = vadd.f32 %v670, %v671
          %v673 = vrot.slane %v672, 1
          %v674 = vadd.f32 %v672, %v673
          %s675 = vtos %v674
          %vm676 = vcmp.eq.s32.totalorder %v579, 1
          %v677 = vstv %s615
          %v678 = vsel %vm676, %v677, 0.0
          %v679 = vadd.f32 %v586, %v678
          %vm680 = vcmp.eq.s32.totalorder %v579, 2
          %v681 = vstv %s675
          %v682 = vsel %vm680, %v681, 0.0
          %v683 = vadd.f32 %v679, %v682
          %684 = vst [vmem:[%s476] sm:$0x1] %v683
        $region76: #{tpu_custom_call.1} parent=47 // pred_fallthru
          _
        %p685 = scmp.gt.s32.totalorder %s30, 0
        // Predicated region
        $region77: #{tpu_custom_call.1} parent=47 // pred_check
          %p686 = pneg %p685
        $region78: #{tpu_custom_call.1} parent=47 // pred_check_branch
          %688 = sbr.rel (%p686) target = $region80
        $region79: #{tpu_custom_call.1} parent=47 // pred_region
          %v689 = vld [vmem:[%s476] sm:$0x1]
          %v690 = vadd.f32 %v689, %v586
          %691 = vst [vmem:[%s476] sm:$0x1] %v690
        $region80: #{tpu_custom_call.1} parent=47 // pred_fallthru
          _
        %s692 = sand.u32 %s228, 1
        %s693 = scalar_lea.sflag [#allocation4], %s692
        %s694 = sand.u32 %s228, 1
        %s695 = scalar_lea.vmem [#allocation11], %s694
        // Predicated region
        $region81: #{tpu_custom_call.1} parent=47 // pred_check
          %p696 = pneg %p238
        $region82: #{tpu_custom_call.1} parent=47 // pred_check_branch
          %698 = sbr.rel (%p696) target = $region84
        $region83: #{tpu_custom_call.1} parent=47 // pred_region
          %s700 = ssub.s32 16, 16
          %701 = vsyncadd %s693, %s700
          %s702 = smul.addr %s29, 16
          %s703 = scalar_lea.hbm %s7, %s702
          %s705 = sshll.u32 %s695, 4
          %s706 = int_to_ptr.vmem [resolvable:$true] %s705
          %708 = dma.vmem_to_hbm [thread:$0]  %s706, 16, %s703, %s693
        $region84: #{tpu_custom_call.1} parent=47 // pred_fallthru
          _
      $region48: #{tpu_custom_call.1} parent=5 // pred_fallthru
        _
      %p709 = scmp.le.s32.totalorder 2, %s20
      // Predicated region
      $region85: #{tpu_custom_call.1} parent=5 // pred_check
        %p710 = pneg %p709
      $region86: #{tpu_custom_call.1} parent=5 // pred_check_branch
        %712 = sbr.rel (%p710) target = $region88
      $region87: #{tpu_custom_call.1} parent=5 // pred_region
        %s713 = ssub.s32 %s20, 2
        // Predicated region
        $region89: #{tpu_custom_call.1} parent=87 // pred_check
          %p714 = pneg %p244
        $region90: #{tpu_custom_call.1} parent=87 // pred_check_branch
          %716 = sbr.rel (%p714) target = $region92
        $region91: #{tpu_custom_call.1} parent=87 // pred_region
          %s717 = sand.u32 %s229, 1
          %s718 = scalar_lea.sflag [#allocation4], %s717
          %s719 = sand.u32 %s229, 1
          %s720 = scalar_lea.vmem [#allocation11], %s719
          %721 = dma.done %s718, 16
        $region92: #{tpu_custom_call.1} parent=87 // pred_fallthru
          _
      $region88: #{tpu_custom_call.1} parent=5 // pred_fallthru
        _
    $region6: #{tpu_custom_call.1} parent=1 // loop_footer
      %s24 = sadd.s32 1, %s20
    $region7: #{tpu_custom_call.1} parent=1 // loop_footer_branch
      %19 = sbr.rel target = $region3
    $region8: #{tpu_custom_call.1} parent=1 // loop_exit
      _
    %722 = vsyncpa [#allocation3], 1
    %s723 = scalar_lea.sflag [#allocation3], 1
    %724 = vsyncpa %s723, 1
    %725 = vsyncpa [#allocation6], 1
    %726 = vsyncpa [#allocation4], 1
    %s727 = scalar_lea.sflag [#allocation4], 1
    %728 = vsyncpa %s727, 1

</llo_original>
